<compile_context>
chip_gen: v6e
topology: v6e:2x2x1
jax: 0.10.0
libtpu: 0.0.40
codegen_flags: <defaults>
</compile_context>

<pallas_src>
import functools

import jax
import jax.numpy as jnp
from jax.experimental import pallas as pl
from jax.experimental.pallas import tpu as pltpu


# --------------------------------------------------------------------------
# Small helpers
# --------------------------------------------------------------------------
def _round_up(x, m):
    return (x + m - 1) // m * m


def _vmem_capacity():
    """Per-core VMEM bytes; conservative 64 MiB (v7x) if the query fails."""
    try:
        return int(pltpu.get_tpu_info().vmem_capacity_bytes)
    except Exception:
        return 64 * 1024 * 1024


def _pad_table(tbl, dtype):
    """Cast an embedding table and zero-pad D to a multiple of 128 (lane-full
    rows; the zero columns contribute 0 to both L1 and L2 scores)."""
    _, D = tbl.shape
    d_pad = _round_up(D, 128)
    tbl = tbl.astype(dtype)
    if d_pad != D:
        tbl = jnp.pad(tbl, ((0, 0), (0, d_pad - D)))
    return tbl


# --------------------------------------------------------------------------
# Kernels
# --------------------------------------------------------------------------
def _transe_fused_kernel(l1_flag, ent_ref, rel_ref,
                         h_idx_ref, t_idx_ref, r_idx_ref, out_ref):
    """Tables are whole VMEM-resident refs; index tiles are (1, tile_b) int32.
    Gathers rows in-kernel, computes d = h + r - t in the table dtype and
    accumulates the lane reduction in f32.  Lane-dense (1, tile_b) f32 out."""
    ent = ent_ref[...]
    rel = rel_ref[...]
    h = jnp.take(ent, h_idx_ref[0, :], axis=0)
    t = jnp.take(ent, t_idx_ref[0, :], axis=0)
    r = jnp.take(rel, r_idx_ref[0, :], axis=0)
    d = h + r - t
    if l1_flag:
        s = jnp.sum(jnp.abs(d), axis=1, dtype=jnp.float32)
    else:
        s = jnp.sum(d * d, axis=1, dtype=jnp.float32)
    out_ref[0, :] = s


def _transe_streaming_kernel(l1_flag, h_ref, t_ref, r_ref, out_ref):
    """Pre-gathered (tile_b, D_pad) streams; d stays in the stream dtype
    (bf16 by default), the reduction accumulates in f32, lane-dense store."""
    d = h_ref[...] + r_ref[...] - t_ref[...]
    if l1_flag:
        s = jnp.sum(jnp.abs(d), axis=1, dtype=jnp.float32)
    else:
        s = jnp.sum(d * d, axis=1, dtype=jnp.float32)
    out_ref[0, :] = s


# --------------------------------------------------------------------------
# pallas_call wrappers
# --------------------------------------------------------------------------
def _transe_scores_fused(ent_tbl, rel_tbl, h_idx, t_idx, r_idx, *,
                         l1_flag, tile_b=None):
    """Scores with in-kernel gather from VMEM-resident tables.

    ent_tbl/rel_tbl: (E, D_pad) / (R, D_pad), D_pad % 128 == 0, already cast.
    h_idx/t_idx/r_idx: (N,) int32.  Returns (N,) f32.
    """
    N = int(h_idx.shape[0])
    _, D_pad = ent_tbl.shape
    itemsize = ent_tbl.dtype.itemsize
    table_bytes = (ent_tbl.size + rel_tbl.size) * itemsize
    vmem_cap = _vmem_capacity()

    if tile_b is None:
        row_bytes = 3 * D_pad * itemsize          # gathered temporaries / row
        temp_budget = max(vmem_cap // 4 - table_bytes, 1 << 20)
        tile_b = min((4 << 20) // row_bytes,      # per-step payload target
                     temp_budget // row_bytes,    # temp VMEM cap
                     max(1, pl.cdiv(N, 2)),       # grid >= 2 (v7x 2-TC)
                     4096)
    tile_b = max(128, _round_up(min(tile_b, max(N, 1)), 128))
    num_tiles = pl.cdiv(N, tile_b)
    n_pad = num_tiles * tile_b

    def prep_idx(ix):
        ix = ix.astype(jnp.int32)
        if n_pad != N:
            ix = jnp.pad(ix, (0, n_pad - N))      # index 0 is always valid
        return ix.reshape(num_tiles, tile_b)

    h2 = prep_idx(h_idx)
    t2 = prep_idx(t_idx)
    r2 = prep_idx(r_idx)

    vmem_limit = int(min(vmem_cap * 0.9,
                         max(32 << 20,
                             table_bytes
                             + 4 * 3 * tile_b * D_pad * itemsize
                             + (8 << 20))))

    tbl_spec = pl.BlockSpec(memory_space=pltpu.MemorySpace.VMEM)
    idx_spec = pl.BlockSpec((1, tile_b), lambda i: (i, 0))
    out_spec = pl.BlockSpec((1, tile_b), lambda i: (i, 0))

    out = pl.pallas_call(
        functools.partial(_transe_fused_kernel, l1_flag),
        out_shape=jax.ShapeDtypeStruct((num_tiles, tile_b), jnp.float32),
        grid=(num_tiles,),
        in_specs=[tbl_spec, tbl_spec, idx_spec, idx_spec, idx_spec],
        out_specs=out_spec,
        compiler_params=pltpu.CompilerParams(
            dimension_semantics=("parallel",),
            vmem_limit_bytes=vmem_limit),
    )(ent_tbl, rel_tbl, h2, t2, r2)
    return out.reshape(-1)[:N]


def _transe_scores_streaming(h_e, t_e, r_e, *, l1_flag, tile_b=None):
    """Scores from pre-gathered (N, D_pad) streams.  Returns (N,) f32."""
    N, D_pad = h_e.shape
    itemsize = h_e.dtype.itemsize
    vmem_cap = _vmem_capacity()

    if tile_b is None:
        row_bytes = 3 * D_pad * itemsize
        tile_b = min((4 << 20) // row_bytes,                       # payload
                     min(vmem_cap // 3, 48 << 20) // (2 * row_bytes),  # VMEM
                     max(1, pl.cdiv(N, 2)))                        # grid >= 2
    tile_b = max(128, _round_up(min(tile_b, max(N, 1)), 128))
    num_tiles = pl.cdiv(N, tile_b)

    vmem_limit = int(min(vmem_cap * 0.9,
                         max(32 << 20,
                             2 * 3 * tile_b * D_pad * itemsize + (8 << 20))))

    emb_spec = pl.BlockSpec((tile_b, D_pad), lambda i: (i, 0))
    out_spec = pl.BlockSpec((1, tile_b), lambda i: (i, 0))

    out = pl.pallas_call(
        functools.partial(_transe_streaming_kernel, l1_flag),
        out_shape=jax.ShapeDtypeStruct((num_tiles, tile_b), jnp.float32),
        grid=(num_tiles,),
        in_specs=[emb_spec, emb_spec, emb_spec],
        out_specs=out_spec,
        compiler_params=pltpu.CompilerParams(
            dimension_semantics=("parallel",),
            vmem_limit_bytes=vmem_limit),
    )(h_e, t_e, r_e)
    return out.reshape(-1)[:N]


# --------------------------------------------------------------------------
# In-kernel gather support probe (once per dtype).  Uses exactly-representable
# integer rows so a wrong gather is detected while dtype rounding is exact.
# --------------------------------------------------------------------------
_FUSED_GATHER_SUPPORT = {}


def _fused_gather_supported(dtype):
    key = jnp.dtype(dtype).name
    if key not in _FUSED_GATHER_SUPPORT:
        try:
            E, D, n = 256, 128, 256
            ent = jnp.broadcast_to(
                jnp.arange(E, dtype=jnp.float32)[:, None], (E, D)).astype(dtype)
            rel = jnp.zeros((8, D), dtype)
            h = ((jnp.arange(n) * 7 + 3) % E).astype(jnp.int32)
            t = ((jnp.arange(n) * 13 + 5) % E).astype(jnp.int32)
            r = (jnp.arange(n) % 8).astype(jnp.int32)
            got = _transe_scores_fused(ent, rel, h, t, r,
                                       l1_flag=True, tile_b=128)
            got = jax.block_until_ready(got)
            want = jnp.abs((h - t).astype(jnp.float32)) * D
            ok = bool(jnp.allclose(got, want, atol=0.5))
        except Exception:
            ok = False
        _FUSED_GATHER_SUPPORT[key] = ok
    return _FUSED_GATHER_SUPPORT[key]


# --------------------------------------------------------------------------
# Forward (mirrors TransEModel.forward)
# --------------------------------------------------------------------------
def transe_forward(ent_emb, rel_emb, pos_h, pos_t, pos_r, neg_h, neg_t, neg_r,
                   *, l1_flag=True, compute_dtype=jnp.bfloat16, tile_b=None,
                   allow_fused_gather=True):
    """Embedding lookup + fused TransE score.  Returns (pos, neg) f32 (B,).

    compute_dtype=bfloat16 holds/streams embeddings in bf16 (halves HBM bytes
    on a purely bandwidth-bound op) and accumulates the row reduction in f32;
    pass jnp.float32 for results bit-comparable to the f32 PyTorch module.
    NOTE: out-of-range indices are clamped (torch.nn.Embedding would raise);
    callers must pass valid indices.  The fused-vs-streaming dispatch below
    uses Python-level try/except, so jit the chosen path directly if needed.
    """
    B = pos_h.shape[0]
    # One concatenated (2B,) index stream per role -> 3 streams instead of 6.
    h_idx = jnp.concatenate([pos_h, neg_h], axis=0).astype(jnp.int32)
    t_idx = jnp.concatenate([pos_t, neg_t], axis=0).astype(jnp.int32)
    r_idx = jnp.concatenate([pos_r, neg_r], axis=0).astype(jnp.int32)

    # One-time cast + D padding of the tables (hoist out of the step in a
    # real training loop).
    ent_tbl = _pad_table(ent_emb, compute_dtype)
    rel_tbl = _pad_table(rel_emb, compute_dtype)

    vmem_cap = _vmem_capacity()
    table_bytes = (ent_tbl.size * ent_tbl.dtype.itemsize
                   + rel_tbl.size * rel_tbl.dtype.itemsize)

    if (allow_fused_gather
            and table_bytes <= vmem_cap // 4
            and _fused_gather_supported(compute_dtype)):
        try:
            scores = _transe_scores_fused(ent_tbl, rel_tbl,
                                          h_idx, t_idx, r_idx,
                                          l1_flag=l1_flag, tile_b=tile_b)
            return scores[:B], scores[B:]
        except Exception:
            pass  # fall through to the streaming path

    # Streaming fallback: XLA gather, then 3 (2B, D_pad) streams through the
    # kernel (embedding rows cross HBM twice -> fused path is preferred).
    h_e = jnp.take(ent_tbl, h_idx, axis=0)
    t_e = jnp.take(ent_tbl, t_idx, axis=0)
    r_e = jnp.take(rel_tbl, r_idx, axis=0)
    scores = _transe_scores_streaming(h_e, t_e, r_e,
                                      l1_flag=l1_flag, tile_b=tile_b)
    return scores[:B], scores[B:]


# --------------------------------------------------------------------------
# Parameter init matching the PyTorch module
# --------------------------------------------------------------------------
def _xavier_uniform(key, shape):
    fan_in, fan_out = shape[0], shape[1]
    bound = (6.0 / (fan_in + fan_out)) ** 0.5
    return jax.random.uniform(key, shape, jnp.float32, -bound, bound)


def _l2_normalize_rows(x, eps=1e-12):
    # Matches torch.nn.functional.normalize(x, p=2, dim=1).
    norm = jnp.sqrt(jnp.sum(x * x, axis=1, keepdims=True))
    return x / jnp.maximum(norm, eps)


# --------------------------------------------------------------------------
# Self-test
# --------------------------------------------------------------------------
if __name__ == "__main__":
    entity_total = 64
    relation_total = 32
    embedding_size = 128
    batch_size = 8

    key = jax.random.PRNGKey(0)
    k_ent, k_rel, k_idx = jax.random.split(key, 3)

    ent_emb = _l2_normalize_rows(
        _xavier_uniform(k_ent, (entity_total, embedding_size)))
    rel_emb = _l2_normalize_rows(
        _xavier_uniform(k_rel, (relation_total, embedding_size)))

    ks = jax.random.split(k_idx, 6)
    pos_h = jax.random.randint(ks[0], (batch_size,), 0, entity_total)
    pos_t = jax.random.randint(ks[1], (batch_size,), 0, entity_total)
    pos_r = jax.random.randint(ks[2], (batch_size,), 0, relation_total)
    neg_h = jax.random.randint(ks[3], (batch_size,), 0, entity_total)
    neg_t = jax.random.randint(ks[4], (batch_size,), 0, entity_total)
    neg_r = jax.random.randint(ks[5], (batch_size,), 0, relation_total)

    def ref_scores(h, t, r, l1_flag, dtype):
        he = ent_emb.astype(dtype)[h]
        te = ent_emb.astype(dtype)[t]
        re_ = rel_emb.astype(dtype)[r]
        d = (he + re_ - te).astype(jnp.float32)
        return (jnp.sum(jnp.abs(d), axis=1) if l1_flag
                else jnp.sum(d * d, axis=1))

    # --- 1) default path: bf16 embeddings, L1 scores -----------------------
    pos, neg = transe_forward(ent_emb, rel_emb,
                              pos_h, pos_t, pos_r,
                              neg_h, neg_t, neg_r,
                              l1_flag=True)
    jax.block_until_ready((pos, neg))
    assert pos.shape == (batch_size,) and neg.shape == (batch_size,)
    assert jnp.allclose(pos, ref_scores(pos_h, pos_t, pos_r, True,
                                        jnp.bfloat16),
                        rtol=3e-2, atol=5e-2), "bf16 L1 pos"
    assert jnp.allclose(neg, ref_scores(neg_h, neg_t, neg_r, True,
                                        jnp.bfloat16),
                        rtol=3e-2, atol=5e-2), "bf16 L1 neg"

    # --- 2) exact f32 path, L1 (faithful to the PyTorch module) ------------
    pos32, neg32 = transe_forward(ent_emb, rel_emb,
                                  pos_h, pos_t, pos_r,
                                  neg_h, neg_t, neg_r,
                                  l1_flag=True, compute_dtype=jnp.float32)
    jax.block_until_ready((pos32, neg32))
    assert jnp.allclose(pos32, ref_scores(pos_h, pos_t, pos_r, True,
                                          jnp.float32),
                        rtol=1e-5, atol=1e-4), "f32 L1 pos"
    assert jnp.allclose(neg32, ref_scores(neg_h, neg_t, neg_r, True,
                                          jnp.float32),
                        rtol=1e-5, atol=1e-4), "f32 L1 neg"

    # --- 3) exact f32 path, L2 (L1_flag=False branch) -----------------------
    posl2, negl2 = transe_forward(ent_emb, rel_emb,
                                  pos_h, pos_t, pos_r,
                                  neg_h, neg_t, neg_r,
                                  l1_flag=False, compute_dtype=jnp.float32)
    jax.block_until_ready((posl2, negl2))
    assert jnp.allclose(posl2, ref_scores(pos_h, pos_t, pos_r, False,
                                          jnp.float32),
                        rtol=1e-5, atol=1e-4), "f32 L2 pos"
    assert jnp.allclose(negl2, ref_scores(neg_h, neg_t, neg_r, False,
                                          jnp.float32),
                        rtol=1e-5, atol=1e-4), "f32 L2 neg"

    print("KERNEL_OK")
</pallas_src>

<mosaic_0001>
module attributes {stable_mosaic.version = 11 : i64} {
  func.func @_transe_streaming_kernel(%arg0: i32, %arg1: memref<128x128xbf16, #tpu.memory_space<vmem>>, %arg2: memref<128x128xbf16, #tpu.memory_space<vmem>>, %arg3: memref<128x128xbf16, #tpu.memory_space<vmem>>, %arg4: memref<1x128xf32, #tpu.memory_space<vmem>>) attributes {dimension_semantics = [#tpu.dimension_semantics<parallel>], iteration_bounds = array<i64: 1>, scalar_prefetch = 0 : i64, scratch_operands = 0 : i64, tpu.core_type = #tpu.core_type<tc>, window_params = [{transform_indices = @transform_0, window_bounds = array<i64: 128, 128>}, {transform_indices = @transform_1, window_bounds = array<i64: 128, 128>}, {transform_indices = @transform_2, window_bounds = array<i64: 128, 128>}, {transform_indices = @transform_3, window_bounds = array<i64: 1, 128>}]} {
    %c0 = arith.constant 0 : index
    %c0_0 = arith.constant 0 : index
    %0 = vector.load %arg1[%c0, %c0_0] : memref<128x128xbf16, #tpu.memory_space<vmem>>, vector<128x128xbf16>
    %c0_1 = arith.constant 0 : index
    %c0_2 = arith.constant 0 : index
    %1 = vector.load %arg3[%c0_1, %c0_2] : memref<128x128xbf16, #tpu.memory_space<vmem>>, vector<128x128xbf16>
    %2 = arith.addf %0, %1 : vector<128x128xbf16>
    %c0_3 = arith.constant 0 : index
    %c0_4 = arith.constant 0 : index
    %3 = vector.load %arg2[%c0_3, %c0_4] : memref<128x128xbf16, #tpu.memory_space<vmem>>, vector<128x128xbf16>
    %4 = arith.subf %2, %3 : vector<128x128xbf16>
    %5 = math.absf %4 : vector<128x128xbf16>
    %6 = arith.extf %5 : vector<128x128xbf16> to vector<128x128xf32>
    %cst = arith.constant dense<0.000000e+00> : vector<128xf32>
    %7 = vector.multi_reduction <add>, %6, %cst [1] : vector<128x128xf32> to vector<128xf32>
    %c0_5 = arith.constant 0 : index
    %c0_6 = arith.constant 0 : index
    %8 = vector.load %arg4[%c0_5, %c0_6] : memref<1x128xf32, #tpu.memory_space<vmem>>, vector<1x128xf32>
    %9 = vector.shape_cast %8 : vector<1x128xf32> to vector<128xf32>
    %10 = vector.shape_cast %7 : vector<128xf32> to vector<1x128xf32>
    tpu.vector_store %arg4[%c0_5, %c0_6], %10 {strides = array<i32>} : memref<1x128xf32, #tpu.memory_space<vmem>>, vector<1x128xf32>,
    return
  }
  func.func @transform_0(%arg0: i32) -> (i32, i32) {
    %c0_i32 = arith.constant 0 : i32
    %c0_i32_0 = arith.constant 0 : i32
    return %arg0, %c0_i32 : i32, i32
  }
  func.func @transform_1(%arg0: i32) -> (i32, i32) {
    %c0_i32 = arith.constant 0 : i32
    %c0_i32_0 = arith.constant 0 : i32
    return %arg0, %c0_i32 : i32, i32
  }
  func.func @transform_2(%arg0: i32) -> (i32, i32) {
    %c0_i32 = arith.constant 0 : i32
    %c0_i32_0 = arith.constant 0 : i32
    return %arg0, %c0_i32 : i32, i32
  }
  func.func @transform_3(%arg0: i32) -> (i32, i32) {
    %c0_i32 = arith.constant 0 : i32
    %c0_i32_0 = arith.constant 0 : i32
    return %arg0, %c0_i32 : i32, i32
  }
}

</mosaic_0001>

<llo_original>
// kernel: tpu_custom_call.1
$region0: #{tpu_custom_call.1}
  #allocation0 [shape = 'u32[]', space=smem, size = 0x4, offset = 0x4, fixed_abs, tag = 'smem constant byte address 0x4 - core index']
  #allocation1 [shape = 'u32[144,128]{1,0:T(1,128)}', space=vmem, size = 0x12000, scoped, tag = 'internal scratch']
  %s0 = inlined_call_operand.hbm [shape: bf16[16,128], index: 0, kind: input, shape index: {}]
  %s1 = inlined_call_operand.hbm [shape: bf16[16,128], index: 1, kind: input, shape index: {}]
  %s2 = inlined_call_operand.hbm [shape: bf16[16,128], index: 2, kind: input, shape index: {}]
  %s3 = inlined_call_operand.hbm [shape: f32[1,128], index: 3, kind: output, shape index: {}]
  %s4 = sld [smem:[#allocation0]]
  $region34: #{tpu_custom_call.1} parent=0
    _
  %s6 = ssub.s32 1, %s4
  %s7 = scalar_select 0, %s6, %s4
  $region1: #{tpu_custom_call.1} parent=0
    #allocation2 [shape = 'u8[32768]{0}', space=vmem, size = 0x8000, scoped, tag = 'input window, operand 0, single buffered']
    #allocation3 [shape = 's32[1]{0}', space=sflag, size = 0x4, scoped, tag = 'scoped memory for tpu_custom_call.1']
    #allocation4 [shape = 's32[1]{0}', space=sflag, size = 0x4, scoped, tag = 'scoped memory for tpu_custom_call.1']
    #allocation5 [shape = 'u8[32768]{0}', space=vmem, size = 0x8000, scoped, tag = 'input window, operand 1, single buffered']
    #allocation6 [shape = 's32[1]{0}', space=sflag, size = 0x4, scoped, tag = 'scoped memory for tpu_custom_call.1']
    #allocation7 [shape = 'u8[32768]{0}', space=vmem, size = 0x8000, scoped, tag = 'input window, operand 2, single buffered']
    #allocation8 [shape = 'u8[512]{0}', space=vmem, size = 0x400, scoped, tag = 'output window, operand 0, single buffered']
    %8 = vsyncpa [#allocation3], 0
    %9 = vsyncpa [#allocation6], 0
    %10 = vsyncpa [#allocation4], 0
    // Predicated region
    $region2: #{tpu_custom_call.1} parent=1 // pred_check
      _
    $region3: #{tpu_custom_call.1} parent=1 // pred_check_branch
      %12 = sbr.rel (0) target = $region5
    $region4: #{tpu_custom_call.1} parent=1 // pred_region
      %s14 = ssub.s32 1024, 128
      %15 = vsyncadd [#allocation3], %s14
      %s16 = sshll.u32 [#allocation2], 4
      %s17 = int_to_ptr.vmem [resolvable:$true] %s16
      %22 = dma.hbm_to_vmem [thread:$0]  %s0, 128, %s17, [#allocation3], 64, 64, 4
    $region5: #{tpu_custom_call.1} parent=1 // pred_fallthru
      _
    // Predicated region
    $region6: #{tpu_custom_call.1} parent=1 // pred_check
      _
    $region7: #{tpu_custom_call.1} parent=1 // pred_check_branch
      %24 = sbr.rel (0) target = $region9
    $region8: #{tpu_custom_call.1} parent=1 // pred_region
      %s26 = ssub.s32 1024, 128
      %27 = vsyncadd [#allocation6], %s26
      %s28 = sshll.u32 [#allocation5], 4
      %s29 = int_to_ptr.vmem [resolvable:$true] %s28
      %34 = dma.hbm_to_vmem [thread:$0]  %s1, 128, %s29, [#allocation6], 64, 64, 4
    $region9: #{tpu_custom_call.1} parent=1 // pred_fallthru
      _
    // Predicated region
    $region10: #{tpu_custom_call.1} parent=1 // pred_check
      _
    $region11: #{tpu_custom_call.1} parent=1 // pred_check_branch
      %36 = sbr.rel (0) target = $region13
    $region12: #{tpu_custom_call.1} parent=1 // pred_region
      %s38 = ssub.s32 1024, 128
      %39 = vsyncadd [#allocation6], %s38
      %s40 = sshll.u32 [#allocation7], 4
      %s41 = int_to_ptr.vmem [resolvable:$true] %s40
      %46 = dma.hbm_to_vmem [thread:$0]  %s2, 128, %s41, [#allocation6], 64, 64, 4
    $region13: #{tpu_custom_call.1} parent=1 // pred_fallthru
      _
    // Predicated region
    $region14: #{tpu_custom_call.1} parent=1 // pred_check
      _
    $region15: #{tpu_custom_call.1} parent=1 // pred_check_branch
      %48 = sbr.rel (0) target = $region17
    $region16: #{tpu_custom_call.1} parent=1 // pred_region
      %49 = dma.done [#allocation3], 1024
    $region17: #{tpu_custom_call.1} parent=1 // pred_fallthru
      _
    // Predicated region
    $region18: #{tpu_custom_call.1} parent=1 // pred_check
      _
    $region19: #{tpu_custom_call.1} parent=1 // pred_check_branch
      %51 = sbr.rel (0) target = $region21
    $region20: #{tpu_custom_call.1} parent=1 // pred_region
      %52 = dma.done [#allocation6], 1024
    $region21: #{tpu_custom_call.1} parent=1 // pred_fallthru
      _
    // Predicated region
    $region22: #{tpu_custom_call.1} parent=1 // pred_check
      _
    $region23: #{tpu_custom_call.1} parent=1 // pred_check_branch
      %54 = sbr.rel (0) target = $region25
    $region24: #{tpu_custom_call.1} parent=1 // pred_region
      %55 = dma.done [#allocation6], 1024
    $region25: #{tpu_custom_call.1} parent=1 // pred_fallthru
      _
    %v56 = vld [vmem:[#allocation2] sm:$0xf]
    %v57 = vld [vmem:[#allocation2 + $0x4] sm:$0xf]
    %v58 = vld [vmem:[#allocation2 + $0x8] sm:$0xf]
    %v59 = vld [vmem:[#allocation2 + $0xc] sm:$0xf]
    %v60 = vld [vmem:[#allocation2 + $0x10] sm:$0xf]
    %v61 = vld [vmem:[#allocation2 + $0x14] sm:$0xf]
    %v62 = vld [vmem:[#allocation2 + $0x18] sm:$0xf]
    %v63 = vld [vmem:[#allocation2 + $0x1c] sm:$0xf]
    %v64 = vld [vmem:[#allocation2 + $0x20] sm:$0xf]
    %v65 = vld [vmem:[#allocation2 + $0x24] sm:$0xf]
    %v66 = vld [vmem:[#allocation2 + $0x28] sm:$0xf]
    %v67 = vld [vmem:[#allocation2 + $0x2c] sm:$0xf]
    %v68 = vld [vmem:[#allocation2 + $0x30] sm:$0xf]
    %v69 = vld [vmem:[#allocation2 + $0x34] sm:$0xf]
    %v70 = vld [vmem:[#allocation2 + $0x38] sm:$0xf]
    %v71 = vld [vmem:[#allocation2 + $0x3c] sm:$0xf]
    %v72 = vld [vmem:[#allocation7] sm:$0xf]
    %v73 = vld [vmem:[#allocation7 + $0x4] sm:$0xf]
    %v74 = vld [vmem:[#allocation7 + $0x8] sm:$0xf]
    %v75 = vld [vmem:[#allocation7 + $0xc] sm:$0xf]
    %v76 = vld [vmem:[#allocation7 + $0x10] sm:$0xf]
    %v77 = vld [vmem:[#allocation7 + $0x14] sm:$0xf]
    %v78 = vld [vmem:[#allocation7 + $0x18] sm:$0xf]
    %v79 = vld [vmem:[#allocation7 + $0x1c] sm:$0xf]
    %v80 = vld [vmem:[#allocation7 + $0x20] sm:$0xf]
    %v81 = vld [vmem:[#allocation7 + $0x24] sm:$0xf]
    %v82 = vld [vmem:[#allocation7 + $0x28] sm:$0xf]
    %v83 = vld [vmem:[#allocation7 + $0x2c] sm:$0xf]
    %v84 = vld [vmem:[#allocation7 + $0x30] sm:$0xf]
    %v85 = vld [vmem:[#allocation7 + $0x34] sm:$0xf]
    %v86 = vld [vmem:[#allocation7 + $0x38] sm:$0xf]
    %v87 = vld [vmem:[#allocation7 + $0x3c] sm:$0xf]
    %v88 = vadd.bf16 %v56, %v72
    %v89 = vadd.bf16 %v57, %v73
    %v90 = vadd.bf16 %v58, %v74
    %v91 = vadd.bf16 %v59, %v75
    %v92 = vadd.bf16 %v60, %v76
    %v93 = vadd.bf16 %v61, %v77
    %v94 = vadd.bf16 %v62, %v78
    %v95 = vadd.bf16 %v63, %v79
    %v96 = vadd.bf16 %v64, %v80
    %v97 = vadd.bf16 %v65, %v81
    %v98 = vadd.bf16 %v66, %v82
    %v99 = vadd.bf16 %v67, %v83
    %v100 = vadd.bf16 %v68, %v84
    %v101 = vadd.bf16 %v69, %v85
    %v102 = vadd.bf16 %v70, %v86
    %v103 = vadd.bf16 %v71, %v87
    %v104 = vld [vmem:[#allocation5] sm:$0xf]
    %v105 = vld [vmem:[#allocation5 + $0x4] sm:$0xf]
    %v106 = vld [vmem:[#allocation5 + $0x8] sm:$0xf]
    %v107 = vld [vmem:[#allocation5 + $0xc] sm:$0xf]
    %v108 = vld [vmem:[#allocation5 + $0x10] sm:$0xf]
    %v109 = vld [vmem:[#allocation5 + $0x14] sm:$0xf]
    %v110 = vld [vmem:[#allocation5 + $0x18] sm:$0xf]
    %v111 = vld [vmem:[#allocation5 + $0x1c] sm:$0xf]
    %v112 = vld [vmem:[#allocation5 + $0x20] sm:$0xf]
    %v113 = vld [vmem:[#allocation5 + $0x24] sm:$0xf]
    %v114 = vld [vmem:[#allocation5 + $0x28] sm:$0xf]
    %v115 = vld [vmem:[#allocation5 + $0x2c] sm:$0xf]
    %v116 = vld [vmem:[#allocation5 + $0x30] sm:$0xf]
    %v117 = vld [vmem:[#allocation5 + $0x34] sm:$0xf]
    %v118 = vld [vmem:[#allocation5 + $0x38] sm:$0xf]
    %v119 = vld [vmem:[#allocation5 + $0x3c] sm:$0xf]
    %v120 = vsub.bf16 %v88, %v104
    %v121 = vsub.bf16 %v89, %v105
    %v122 = vsub.bf16 %v90, %v106
    %v123 = vsub.bf16 %v91, %v107
    %v124 = vsub.bf16 %v92, %v108
    %v125 = vsub.bf16 %v93, %v109
    %v126 = vsub.bf16 %v94, %v110
    %v127 = vsub.bf16 %v95, %v111
    %v128 = vsub.bf16 %v96, %v112
    %v129 = vsub.bf16 %v97, %v113
    %v130 = vsub.bf16 %v98, %v114
    %v131 = vsub.bf16 %v99, %v115
    %v132 = vsub.bf16 %v100, %v116
    %v133 = vsub.bf16 %v101, %v117
    %v134 = vsub.bf16 %v102, %v118
    %v135 = vsub.bf16 %v103, %v119
    %v136 = vand.u32 2147450879, %v120
    %v137 = vand.u32 2147450879, %v121
    %v138 = vand.u32 2147450879, %v122
    %v139 = vand.u32 2147450879, %v123
    %v140 = vand.u32 2147450879, %v124
    %v141 = vand.u32 2147450879, %v125
    %v142 = vand.u32 2147450879, %v126
    %v143 = vand.u32 2147450879, %v127
    %v144 = vand.u32 2147450879, %v128
    %v145 = vand.u32 2147450879, %v129
    %v146 = vand.u32 2147450879, %v130
    %v147 = vand.u32 2147450879, %v131
    %v148 = vand.u32 2147450879, %v132
    %v149 = vand.u32 2147450879, %v133
    %v150 = vand.u32 2147450879, %v134
    %v151 = vand.u32 2147450879, %v135
    %v152 = vunpack.c.l.bf16 %v136
    %v153 = vunpack.c.l.bf16 %v137
    %v154 = vunpack.c.l.bf16 %v138
    %v155 = vunpack.c.l.bf16 %v139
    %v156 = vunpack.c.l.bf16 %v140
    %v157 = vunpack.c.l.bf16 %v141
    %v158 = vunpack.c.l.bf16 %v142
    %v159 = vunpack.c.l.bf16 %v143
    %v160 = vunpack.c.l.bf16 %v144
    %v161 = vunpack.c.l.bf16 %v145
    %v162 = vunpack.c.l.bf16 %v146
    %v163 = vunpack.c.l.bf16 %v147
    %v164 = vunpack.c.l.bf16 %v148
    %v165 = vunpack.c.l.bf16 %v149
    %v166 = vunpack.c.l.bf16 %v150
    %v167 = vunpack.c.l.bf16 %v151
    %168 = vadd.xlane.f32.xlu0 %v152
    %v169 = vpop.xlane.xlu0 %168
    %170 = vadd.xlane.f32.xlu0 %v153
    %v171 = vpop.xlane.xlu0 %170
    %172 = vadd.xlane.f32.xlu0 %v154
    %v173 = vpop.xlane.xlu0 %172
    %174 = vadd.xlane.f32.xlu0 %v155
    %v175 = vpop.xlane.xlu0 %174
    %176 = vadd.xlane.f32.xlu0 %v156
    %v177 = vpop.xlane.xlu0 %176
    %178 = vadd.xlane.f32.xlu0 %v157
    %v179 = vpop.xlane.xlu0 %178
    %180 = vadd.xlane.f32.xlu0 %v158
    %v181 = vpop.xlane.xlu0 %180
    %182 = vadd.xlane.f32.xlu0 %v159
    %v183 = vpop.xlane.xlu0 %182
    %184 = vadd.xlane.f32.xlu0 %v160
    %v185 = vpop.xlane.xlu0 %184
    %186 = vadd.xlane.f32.xlu0 %v161
    %v187 = vpop.xlane.xlu0 %186
    %188 = vadd.xlane.f32.xlu0 %v162
    %v189 = vpop.xlane.xlu0 %188
    %190 = vadd.xlane.f32.xlu0 %v163
    %v191 = vpop.xlane.xlu0 %190
    %192 = vadd.xlane.f32.xlu0 %v164
    %v193 = vpop.xlane.xlu0 %192
    %194 = vadd.xlane.f32.xlu0 %v165
    %v195 = vpop.xlane.xlu0 %194
    %196 = vadd.xlane.f32.xlu0 %v166
    %v197 = vpop.xlane.xlu0 %196
    %198 = vadd.xlane.f32.xlu0 %v167
    %v199 = vpop.xlane.xlu0 %198
    %v216 = vlaneseq
    %v217 = vand.u32 %v216, 127
    %v218 = vlaneseq
    %v219 = vshrl.u32 %v218, 7
    %v220 = vsub.s32 %v217, %v219
    %v221 = vrot.slane %v169, %v220
    %v222 = vadd.s32 %v217, 4294967288
    %v223 = vlaneseq
    %v224 = vshrl.u32 %v223, 7
    %v225 = vsub.s32 %v222, %v224
    %v226 = vrot.slane %v171, %v225
    %vm227 = vcmask 130112
    %v228 = vsel %vm227, %v226, %v221
    %v229 = vadd.s32 %v217, 4294967280
    %v230 = vlaneseq
    %v231 = vshrl.u32 %v230, 7
    %v232 = vsub.s32 %v229, %v231
    %v233 = vrot.slane %v173, %v232
    %vm234 = vcmask 195712
    %v235 = vsel %vm234, %v233, %v228
    %v236 = vadd.s32 %v217, 4294967272
    %v237 = vlaneseq
    %v238 = vshrl.u32 %v237, 7
    %v239 = vsub.s32 %v236, %v238
    %v240 = vrot.slane %v175, %v239
    %vm241 = vcmask 261312
    %v242 = vsel %vm241, %v240, %v235
    %v243 = vadd.s32 %v217, 4294967264
    %v244 = vlaneseq
    %v245 = vshrl.u32 %v244, 7
    %v246 = vsub.s32 %v243, %v245
    %v247 = vrot.slane %v177, %v246
    %vm248 = vcmask 326912
    %v249 = vsel %vm248, %v247, %v242
    %v250 = vadd.s32 %v217, 4294967256
    %v251 = vlaneseq
    %v252 = vshrl.u32 %v251, 7
    %v253 = vsub.s32 %v250, %v252
    %v254 = vrot.slane %v179, %v253
    %vm255 = vcmask 392512
    %v256 = vsel %vm255, %v254, %v249
    %v257 = vadd.s32 %v217, 4294967248
    %v258 = vlaneseq
    %v259 = vshrl.u32 %v258, 7
    %v260 = vsub.s32 %v257, %v259
    %v261 = vrot.slane %v181, %v260
    %vm262 = vcmask 458112
    %v263 = vsel %vm262, %v261, %v256
    %v264 = vadd.s32 %v217, 4294967240
    %v265 = vlaneseq
    %v266 = vshrl.u32 %v265, 7
    %v267 = vsub.s32 %v264, %v266
    %v268 = vrot.slane %v183, %v267
    %vm269 = vcmask 523712
    %v270 = vsel %vm269, %v268, %v263
    %v271 = vadd.s32 %v217, 4294967232
    %v272 = vlaneseq
    %v273 = vshrl.u32 %v272, 7
    %v274 = vsub.s32 %v271, %v273
    %v275 = vrot.slane %v185, %v274
    %vm276 = vcmask 589312
    %v277 = vsel %vm276, %v275, %v270
    %v278 = vadd.s32 %v217, 4294967224
    %v279 = vlaneseq
    %v280 = vshrl.u32 %v279, 7
    %v281 = vsub.s32 %v278, %v280
    %v282 = vrot.slane %v187, %v281
    %vm283 = vcmask 654912
    %v284 = vsel %vm283, %v282, %v277
    %v285 = vadd.s32 %v217, 4294967216
    %v286 = vlaneseq
    %v287 = vshrl.u32 %v286, 7
    %v288 = vsub.s32 %v285, %v287
    %v289 = vrot.slane %v189, %v288
    %vm290 = vcmask 720512
    %v291 = vsel %vm290, %v289, %v284
    %v292 = vadd.s32 %v217, 4294967208
    %v293 = vlaneseq
    %v294 = vshrl.u32 %v293, 7
    %v295 = vsub.s32 %v292, %v294
    %v296 = vrot.slane %v191, %v295
    %vm297 = vcmask 786112
    %v298 = vsel %vm297, %v296, %v291
    %v299 = vadd.s32 %v217, 4294967200
    %v300 = vlaneseq
    %v301 = vshrl.u32 %v300, 7
    %v302 = vsub.s32 %v299, %v301
    %v303 = vrot.slane %v193, %v302
    %vm304 = vcmask 851712
    %v305 = vsel %vm304, %v303, %v298
    %v306 = vadd.s32 %v217, 4294967192
    %v307 = vlaneseq
    %v308 = vshrl.u32 %v307, 7
    %v309 = vsub.s32 %v306, %v308
    %v310 = vrot.slane %v195, %v309
    %vm311 = vcmask 917312
    %v312 = vsel %vm311, %v310, %v305
    %v313 = vadd.s32 %v217, 4294967184
    %v314 = vlaneseq
    %v315 = vshrl.u32 %v314, 7
    %v316 = vsub.s32 %v313, %v315
    %v317 = vrot.slane %v197, %v316
    %vm318 = vcmask 982912
    %v319 = vsel %vm318, %v317, %v312
    %v320 = vadd.s32 %v217, 4294967176
    %v321 = vlaneseq
    %v322 = vshrl.u32 %v321, 7
    %v323 = vsub.s32 %v320, %v322
    %v324 = vrot.slane %v199, %v323
    %vm325 = vcmask 1048512
    %v326 = vsel %vm325, %v324, %v319
    %328 = vst [vmem:[#allocation8] sm:$0x1] %v326
    // Predicated region
    $region26: #{tpu_custom_call.1} parent=1 // pred_check
      _
    $region27: #{tpu_custom_call.1} parent=1 // pred_check_branch
      %330 = sbr.rel (0) target = $region29
    $region28: #{tpu_custom_call.1} parent=1 // pred_region
      %s332 = ssub.s32 16, 16
      %333 = vsyncadd [#allocation4], %s332
      %s335 = sshll.u32 [#allocation8], 4
      %s336 = int_to_ptr.vmem [resolvable:$true] %s335
      %338 = dma.vmem_to_hbm [thread:$0]  %s336, 16, %s3, [#allocation4]
    $region29: #{tpu_custom_call.1} parent=1 // pred_fallthru
      _
    // Predicated region
    $region30: #{tpu_custom_call.1} parent=1 // pred_check
      _
    $region31: #{tpu_custom_call.1} parent=1 // pred_check_branch
      %340 = sbr.rel (0) target = $region33
    $region32: #{tpu_custom_call.1} parent=1 // pred_region
      %341 = dma.done [#allocation4], 16
    $region33: #{tpu_custom_call.1} parent=1 // pred_fallthru
      _
    %342 = vsyncpa [#allocation3], 1
    %343 = vsyncpa [#allocation6], 1
    %344 = vsyncpa [#allocation4], 1

</llo_original>
